<compile_context>
chip_gen: v7x
topology: tpu7x:2x2x1
jax: 0.10.0
libtpu: 0.0.40
codegen_flags: <defaults>
</compile_context>

<pallas_src>
import functools
import math

import jax
import jax.numpy as jnp
from jax.experimental import pallas as pl
from jax.experimental.pallas import tpu as pltpu


def _round_up(x, m):
    return (x + m - 1) // m * m


# --------------------------------------------------------------------------- #
# Kernels
# --------------------------------------------------------------------------- #
def _fused_matmul_kernel(nodes_ref, y_ref, w_ref, side_ref, out_ref, *, z_dim):
    """Pool-folded path: one MXU matmul computes both encoder branches.

    nodes_ref: (tm, K)  bf16  flattened node embeddings (K = n_nodes*h_dim);
                              the sum-pool is folded into w_ref (tiled along K).
    y_ref:     (tm, 1)  f32   y_target column.
    w_ref:     (K, zp)  bf16  [W_mu | W_var | 0-pad], eval-mode BN folded in.
    side_ref:  (2, zp)  f32   row 0 = y-column weights, row 1 = bias/BN shift.
    out_ref:   (tm, zp) f32   cols [0:z) = z_mu, [z:2z) = z_logvar, rest pad.
    """
    pre = (jnp.dot(nodes_ref[...], w_ref[...], preferred_element_type=jnp.float32)
           + y_ref[...] * side_ref[0:1, :]
           + side_ref[1:2, :])
    act = jnp.maximum(pre, 0.0)                                  # ReLU (both branches)
    col = jax.lax.broadcasted_iota(jnp.int32, act.shape, 1)
    is_var = (col >= z_dim) & (col < 2 * z_dim)                  # sigmoid only on var cols
    out_ref[...] = jnp.where(is_var, jax.nn.sigmoid(act), act).astype(out_ref.dtype)


def _pooled_kernel(nodes_ref, y_ref, w_ref, side_ref, out_ref, *, z_dim):
    """Fallback when the K-tiled weight would not fit comfortably in VMEM:
    explicit f32 sum-pool accumulated per node slice (no full-tile f32 temp),
    then one fused matmul on the pooled (tm, h_dim) activations."""
    tm, n_nodes, h_dim = nodes_ref.shape
    g = jnp.zeros((tm, h_dim), jnp.float32)
    for n in range(n_nodes):                       # static unroll, n_nodes is a Python int
        g = g + nodes_ref[:, n, :].astype(jnp.float32)
    pre = (jnp.dot(g.astype(w_ref.dtype), w_ref[...], preferred_element_type=jnp.float32)
           + y_ref[...] * side_ref[0:1, :]
           + side_ref[1:2, :])
    act = jnp.maximum(pre, 0.0)
    col = jax.lax.broadcasted_iota(jnp.int32, act.shape, 1)
    is_var = (col >= z_dim) & (col < 2 * z_dim)
    out_ref[...] = jnp.where(is_var, jax.nn.sigmoid(act), act).astype(out_ref.dtype)


# --------------------------------------------------------------------------- #
# Wrapper
# --------------------------------------------------------------------------- #
def _fold_linear_bn(w, b, gamma, beta, mean, var, eps):
    """Fold eval-mode BatchNorm1d into a Linear's weight/bias:
    BN(x @ w + b) = x @ (w * scale) + ((b - mean) * scale + beta)."""
    scale = gamma / jnp.sqrt(var + eps)            # (z,)
    w_eff = w * scale[None, :]                     # (h+1, z)
    shift = (b - mean) * scale + beta              # (z,)
    return w_eff, shift


def _tpu_config():
    """Return (vmem_budget_bytes, num_tensorcores) for the local TPU generation."""
    kind = ""
    try:
        kind = jax.devices()[0].device_kind.lower()
    except Exception:
        pass
    if "v7" in kind:
        budget, num_tc = 48 << 20, 2        # 64 MiB physical per TC -> leave headroom
    elif "v6" in kind:
        budget, num_tc = 100 << 20, 1       # 128 MiB physical, single TC
    elif "v5" in kind:
        budget, num_tc = 100 << 20, 1       # 128 MiB physical, single TC
    else:
        budget, num_tc = 48 << 20, 2        # unknown: be conservative (v7x-like)
    try:  # refine with the real VMEM capacity when the query is available
        phys = int(getattr(pltpu.get_tpu_info(), "vmem_capacity_bytes", 0))
        if phys > 0:
            budget = min(budget, (phys * 3) // 4)
    except Exception:
        pass
    return budget, num_tc


def graph_encoder_forward(node_emb, y_target, params, *,
                          tm_cap=1024, compute_dtype=jnp.bfloat16, bn_eps=1e-5):
    """node_emb: [B, N_nodes, h_dim] (output of embedder.embedding),
    y_target: [B, 1]. Returns (z_mu, z_logvar), each [B, z_dim] float32."""
    B, n_nodes, h_dim = node_emb.shape
    z_dim = params["w_mu"].shape[1]
    assert params["w_mu"].shape[0] == h_dim + 1
    K = n_nodes * h_dim
    zp = max(128, _round_up(2 * z_dim, 128))       # lane-dense fused/padded output width

    # Fold eval-mode BN into each Linear, fuse the two branches column-wise and
    # split off the y column: cat(g, y) @ W == g @ W_h + y * w_y.
    wmu, smu = _fold_linear_bn(params["w_mu"], params["b_mu"], params["gamma_mu"],
                               params["beta_mu"], params["mean_mu"], params["var_mu"], bn_eps)
    wvar, svar = _fold_linear_bn(params["w_var"], params["b_var"], params["gamma_var"],
                                 params["beta_var"], params["mean_var"], params["var_var"], bn_eps)
    w_h = jnp.concatenate([wmu[:h_dim], wvar[:h_dim]], axis=1)          # (h, 2z)
    w_y = jnp.concatenate([wmu[h_dim:], wvar[h_dim:]], axis=1)          # (1, 2z)
    shift = jnp.concatenate([smu, svar])[None, :]                       # (1, 2z)
    pad_cols = zp - 2 * z_dim
    w_h = jnp.pad(w_h, ((0, 0), (0, pad_cols)))                         # (h, zp)
    side = jnp.pad(jnp.concatenate([w_y, shift], axis=0),
                   ((0, 0), (0, pad_cols))).astype(jnp.float32)         # (2, zp)

    vmem_budget, num_tc = _tpu_config()

    # Prefer folding the sum-pool into the matmul (weight tiled n_nodes times
    # along K -> lane-dense flat node tile, single dot); fall back to the
    # explicit-pool kernel if the tiled weight would eat too much VMEM.
    w_big_bytes = K * zp * 2
    fold_pool = w_big_bytes <= vmem_budget // 8

    # ---- tile sizing from a VMEM byte budget --------------------------------
    if fold_pool:
        node_row_bytes = K * 2                                           # bf16, flat
        resident = w_big_bytes + 8 * zp * 4
    else:
        node_row_bytes = _round_up(n_nodes, 8) * _round_up(h_dim, 128) * 2
        resident = _round_up(h_dim, 8) * zp * 2 + 8 * zp * 4
    # double-buffered node + y (lane-padded to 128) + output tiles, per row:
    per_row = 2 * node_row_bytes + 2 * 128 * 4 + 2 * zp * 4
    avail = max(vmem_budget - 2 * resident - (1 << 20), 8 * per_row)
    tm_budget = max(8, (avail // per_row) // 8 * 8)

    b8 = _round_up(B, 8)
    tm = min(tm_cap, tm_budget, b8)
    if num_tc >= 2:
        # v7x megacore: split into >=2 "parallel" grid steps, but only when each
        # half-tile keeps a meaningful row count (grid step overhead ~0.35 us).
        half = _round_up(pl.cdiv(b8, 2), 8)
        if 256 <= half < tm:
            tm = half
    b_pad = _round_up(B, tm)

    y = y_target.astype(jnp.float32)
    if fold_pool:
        x = node_emb.reshape(B, K).astype(compute_dtype)
        if b_pad != B:
            x = jnp.pad(x, ((0, b_pad - B), (0, 0)))
            y = jnp.pad(y, ((0, b_pad - B), (0, 0)))
        w_dev = jnp.tile(w_h, (n_nodes, 1)).astype(compute_dtype)        # (K, zp)
        kernel = functools.partial(_fused_matmul_kernel, z_dim=z_dim)
        node_spec = pl.BlockSpec((tm, K), lambda i: (i, 0))
        w_spec = pl.BlockSpec((K, zp), lambda i: (0, 0))
    else:
        x = node_emb.astype(compute_dtype)
        if b_pad != B:
            x = jnp.pad(x, ((0, b_pad - B), (0, 0), (0, 0)))
            y = jnp.pad(y, ((0, b_pad - B), (0, 0)))
        w_dev = w_h.astype(compute_dtype)                                # (h, zp)
        kernel = functools.partial(_pooled_kernel, z_dim=z_dim)
        node_spec = pl.BlockSpec((tm, n_nodes, h_dim), lambda i: (i, 0, 0))
        w_spec = pl.BlockSpec((h_dim, zp), lambda i: (0, 0))

    vmem_usage = (2 * tm * node_row_bytes + 2 * tm * 128 * 4 + 2 * tm * zp * 4
                  + resident + (1 << 20))
    vmem_limit = int(min(vmem_budget, max(32 << 20, 2 * vmem_usage)))

    out = pl.pallas_call(
        kernel,
        out_shape=jax.ShapeDtypeStruct((b_pad, zp), jnp.float32),
        grid_spec=pltpu.PrefetchScalarGridSpec(
            num_scalar_prefetch=0,
            grid=(b_pad // tm,),
            in_specs=[
                node_spec,                                      # node embeddings (tiled rows)
                pl.BlockSpec((tm, 1), lambda i: (i, 0)),        # y_target
                w_spec,                                         # fused weight (resident)
                pl.BlockSpec((2, zp), lambda i: (0, 0)),        # [y weights; shift] (resident)
            ],
            out_specs=pl.BlockSpec((tm, zp), lambda i: (i, 0)),  # fused lane-dense output
        ),
        compiler_params=pltpu.CompilerParams(
            dimension_semantics=("parallel",),
            vmem_limit_bytes=vmem_limit,
        ),
    )(x, y, w_dev, side)

    return out[:B, :z_dim], out[:B, z_dim:2 * z_dim]


# --------------------------------------------------------------------------- #
# Pure-JAX reference (same numeric choices: BN fold, bf16 operands, f32 acc)
# --------------------------------------------------------------------------- #
def reference_forward(node_emb, y_target, params, *,
                      compute_dtype=jnp.bfloat16, bn_eps=1e-5):
    B, n_nodes, h_dim = node_emb.shape
    flat = node_emb.reshape(B, n_nodes * h_dim).astype(compute_dtype)
    y = y_target.astype(jnp.float32)

    def branch(w, b, gamma, beta, mean, var, sigmoid):
        scale = gamma / jnp.sqrt(var + bn_eps)
        w_eff = w * scale[None, :]
        shift = (b - mean) * scale + beta
        w_big = jnp.tile(w_eff[:h_dim].astype(compute_dtype), (n_nodes, 1))
        lin = (jnp.dot(flat, w_big, preferred_element_type=jnp.float32)
               + y * w_eff[h_dim:].astype(jnp.float32)
               + shift[None, :])
        act = jnp.maximum(lin, 0.0)
        return jax.nn.sigmoid(act) if sigmoid else act

    z_mu = branch(params["w_mu"], params["b_mu"], params["gamma_mu"],
                  params["beta_mu"], params["mean_mu"], params["var_mu"], False)
    z_var = branch(params["w_var"], params["b_var"], params["gamma_var"],
                   params["beta_var"], params["mean_var"], params["var_var"], True)
    return z_mu, z_var


def init_params(key, h_dim, z_dim):
    """Mimic torch defaults: nn.Linear bound = 1/sqrt(fan_in), weights stored
    [in, out] for x @ W. BN stats randomized a bit so the fold is exercised."""
    ks = jax.random.split(key, 12)
    in_f = h_dim + 1
    bound = 1.0 / math.sqrt(in_f)

    def lin(kw, kb):
        w = jax.random.uniform(kw, (in_f, z_dim), jnp.float32, minval=-bound, maxval=bound)
        b = jax.random.uniform(kb, (z_dim,), jnp.float32, minval=-bound, maxval=bound)
        return w, b

    def bn(k0, k1, k2, k3):
        return (1.0 + 0.1 * jax.random.normal(k0, (z_dim,), jnp.float32),
                0.1 * jax.random.normal(k1, (z_dim,), jnp.float32),
                0.1 * jax.random.normal(k2, (z_dim,), jnp.float32),
                jnp.abs(1.0 + 0.1 * jax.random.normal(k3, (z_dim,), jnp.float32)))

    w_mu, b_mu = lin(ks[0], ks[1])
    g_mu, be_mu, m_mu, v_mu = bn(ks[2], ks[3], ks[4], ks[5])
    w_var, b_var = lin(ks[6], ks[7])
    g_var, be_var, m_var, v_var = bn(ks[8], ks[9], ks[10], ks[11])

    return dict(w_mu=w_mu, b_mu=b_mu, gamma_mu=g_mu, beta_mu=be_mu,
                mean_mu=m_mu, var_mu=v_mu,
                w_var=w_var, b_var=b_var, gamma_var=g_var, beta_var=be_var,
                mean_var=m_var, var_var=v_var)


if __name__ == "__main__":
    key = jax.random.PRNGKey(0)
    k_x, k_y, k_p = jax.random.split(key, 3)

    # Small shapes consistent with the module: B graphs, N nodes/graph, h_dim
    # node-embedding width, z_dim latent width.
    B, N_NODES, H_DIM, Z_DIM = 16, 8, 32, 32

    node_emb = jax.random.normal(k_x, (B, N_NODES, H_DIM), jnp.float32)
    y_target = jax.random.normal(k_y, (B, 1), jnp.float32)
    params = init_params(k_p, H_DIM, Z_DIM)

    z_mu, z_logvar = graph_encoder_forward(node_emb, y_target, params,
                                           tm_cap=1024, compute_dtype=jnp.bfloat16)
    z_mu, z_logvar = jax.block_until_ready((z_mu, z_logvar))

    ref_mu, ref_var = reference_forward(node_emb, y_target, params,
                                        compute_dtype=jnp.bfloat16)
    assert z_mu.shape == (B, Z_DIM) and z_logvar.shape == (B, Z_DIM)
    assert jnp.allclose(z_mu, ref_mu, atol=1e-3, rtol=1e-3), "z_mu mismatch vs reference"
    assert jnp.allclose(z_logvar, ref_var, atol=1e-3, rtol=1e-3), "z_logvar mismatch vs reference"

    print("KERNEL_OK")
</pallas_src>

<mosaic_0001>
module attributes {stable_mosaic.version = 11 : i64} {
  func.func @_fused_matmul_kernel(%arg0: i32, %arg1: memref<16x256xbf16, #tpu.memory_space<vmem>>, %arg2: memref<16x1xf32, #tpu.memory_space<vmem>>, %arg3: memref<256x128xbf16, #tpu.memory_space<vmem>>, %arg4: memref<2x128xf32, #tpu.memory_space<vmem>>, %arg5: memref<16x128xf32, #tpu.memory_space<vmem>>) attributes {dimension_semantics = [#tpu.dimension_semantics<parallel>], iteration_bounds = array<i64: 1>, scalar_prefetch = 0 : i64, scratch_operands = 0 : i64, tpu.core_type = #tpu.core_type<tc>, window_params = [{transform_indices = @transform_0, window_bounds = array<i64: 16, 256>}, {transform_indices = @transform_1, window_bounds = array<i64: 16, 1>}, {pipeline_mode = #tpu.pipeline_mode<synchronous>, transform_indices = @transform_2, window_bounds = array<i64: 256, 128>}, {pipeline_mode = #tpu.pipeline_mode<synchronous>, transform_indices = @transform_3, window_bounds = array<i64: 2, 128>}, {transform_indices = @transform_4, window_bounds = array<i64: 16, 128>}]} {
    %c0 = arith.constant 0 : index
    %c0_0 = arith.constant 0 : index
    %0 = vector.load %arg1[%c0, %c0_0] : memref<16x256xbf16, #tpu.memory_space<vmem>>, vector<16x256xbf16>
    %c0_1 = arith.constant 0 : index
    %c0_2 = arith.constant 0 : index
    %1 = vector.load %arg3[%c0_1, %c0_2] : memref<256x128xbf16, #tpu.memory_space<vmem>>, vector<256x128xbf16>
    %cst = arith.constant dense<0.000000e+00> : vector<16x128xf32>
    %2 = tpu.matmul %0, %1, %cst {dimension_numbers = #tpu.dot_dimension_numbers<[1], [0], [0], [1], [0, 0, 1, 1], [], []>} : vector<16x256xbf16>, vector<256x128xbf16>, vector<16x128xf32> -> vector<16x128xf32>
    %c0_3 = arith.constant 0 : index
    %c0_4 = arith.constant 0 : index
    %3 = vector.load %arg2[%c0_3, %c0_4] : memref<16x1xf32, #tpu.memory_space<vmem>>, vector<16x1xf32>
    %c0_5 = arith.constant 0 : index
    %c0_6 = arith.constant 0 : index
    %4 = vector.load %arg4[%c0_5, %c0_6] : memref<2x128xf32, #tpu.memory_space<vmem>>, vector<1x128xf32>
    %5 = vector.broadcast %3 : vector<16x1xf32> to vector<16x128xf32>
    %6 = vector.broadcast %4 : vector<1x128xf32> to vector<16x128xf32>
    %7 = arith.mulf %5, %6 : vector<16x128xf32>
    %8 = arith.addf %2, %7 : vector<16x128xf32>
    %c1 = arith.constant 1 : index
    %c0_7 = arith.constant 0 : index
    %9 = vector.load %arg4[%c1, %c0_7] : memref<2x128xf32, #tpu.memory_space<vmem>>, vector<1x128xf32>
    %10 = vector.broadcast %9 : vector<1x128xf32> to vector<16x128xf32>
    %11 = arith.addf %8, %10 : vector<16x128xf32>
    %cst_8 = arith.constant 0.000000e+00 : f32
    %12 = vector.broadcast %cst_8 : f32 to vector<16x128xf32>
    %13 = arith.maximumf %11, %12 : vector<16x128xf32>
    %14 = tpu.iota {dimensions = array<i32: 1>} : vector<16x128xi32>
    %c32_i32 = arith.constant 32 : i32
    %15 = vector.broadcast %c32_i32 : i32 to vector<16x128xi32>
    %16 = arith.cmpi sge, %14, %15 : vector<16x128xi32>
    %c64_i32 = arith.constant 64 : i32
    %17 = vector.broadcast %c64_i32 : i32 to vector<16x128xi32>
    %18 = arith.cmpi slt, %14, %17 : vector<16x128xi32>
    %19 = arith.andi %16, %18 : vector<16x128xi1>
    %20 = arith.negf %13 : vector<16x128xf32>
    %21 = math.exp %20 : vector<16x128xf32>
    %cst_9 = arith.constant 1.000000e+00 : f32
    %22 = vector.broadcast %cst_9 : f32 to vector<16x128xf32>
    %23 = arith.addf %22, %21 : vector<16x128xf32>
    %24 = arith.divf %22, %23 : vector<16x128xf32>
    %25 = arith.select %19, %24, %13 : vector<16x128xi1>, vector<16x128xf32>
    %c0_10 = arith.constant 0 : index
    %c0_11 = arith.constant 0 : index
    %26 = vector.load %arg5[%c0_10, %c0_11] : memref<16x128xf32, #tpu.memory_space<vmem>>, vector<16x128xf32>
    tpu.vector_store %arg5[%c0_10, %c0_11], %25 {strides = array<i32>} : memref<16x128xf32, #tpu.memory_space<vmem>>, vector<16x128xf32>,
    return
  }
  func.func @transform_0(%arg0: i32) -> (i32, i32) {
    %c0_i32 = arith.constant 0 : i32
    %c0_i32_0 = arith.constant 0 : i32
    return %arg0, %c0_i32 : i32, i32
  }
  func.func @transform_1(%arg0: i32) -> (i32, i32) {
    %c0_i32 = arith.constant 0 : i32
    %c0_i32_0 = arith.constant 0 : i32
    return %arg0, %c0_i32 : i32, i32
  }
  func.func @transform_2(%arg0: i32) -> (i32, i32) {
    %c0_i32 = arith.constant 0 : i32
    %c0_i32_0 = arith.constant 0 : i32
    %c0_i32_1 = arith.constant 0 : i32
    return %c0_i32, %c0_i32_0 : i32, i32
  }
  func.func @transform_3(%arg0: i32) -> (i32, i32) {
    %c0_i32 = arith.constant 0 : i32
    %c0_i32_0 = arith.constant 0 : i32
    %c0_i32_1 = arith.constant 0 : i32
    return %c0_i32, %c0_i32_0 : i32, i32
  }
  func.func @transform_4(%arg0: i32) -> (i32, i32) {
    %c0_i32 = arith.constant 0 : i32
    %c0_i32_0 = arith.constant 0 : i32
    return %arg0, %c0_i32 : i32, i32
  }
}

</mosaic_0001>

<llo_original>
// kernel: tpu_custom_call.1
$region0: #{tpu_custom_call.1}
  #allocation0 [shape = 'u32[]', space=smem, size = 0x4, offset = 0x4, fixed_abs, tag = 'smem constant byte address 0x4 - core index']
  #allocation1 [shape = 'u32[144,128]{1,0:T(1,128)}', space=vmem, size = 0x12000, scoped, tag = 'internal scratch']
  %s0 = inlined_call_operand.vmem [shape: bf16[16,256], index: 0, kind: input, shape index: {}]
  %s1 = inlined_call_operand.vmem [shape: f32[16,1], index: 1, kind: input, shape index: {}]
  %s2 = inlined_call_operand.hbm [shape: bf16[256,128], index: 2, kind: input, shape index: {}]
  %s3 = inlined_call_operand.vmem [shape: f32[2,128], index: 3, kind: input, shape index: {}]
  %s4 = inlined_call_operand.hbm [shape: f32[16,128], index: 4, kind: output, shape index: {}]
  %s5 = sld [smem:[#allocation0]]
  $region30: #{tpu_custom_call.1} parent=0
    _
  %s7 = ssub.s32 1, %s5
  %s8 = scalar_select 0, %s7, %s5
  $region1: #{tpu_custom_call.1} parent=0
    #allocation2 [shape = 'u8[65536]{0}', space=vmem, size = 0x10000, scoped, tag = 'input window, operand 2, single buffered']
    #allocation3 [shape = 's32[1]{0}', space=sflag, size = 0x4, scoped, tag = 'scoped memory for tpu_custom_call.1']
    #allocation4 [shape = 's32[1]{0}', space=sflag, size = 0x4, scoped, tag = 'scoped memory for tpu_custom_call.1']
    #allocation5 [shape = 'u8[8192]{0}', space=vmem, size = 0x2000, scoped, tag = 'output window, operand 0, single buffered']
    %9 = vsyncpa [#allocation3], 0
    %10 = vsyncpa [#allocation4], 0
    // Predicated region
    $region2: #{tpu_custom_call.1} parent=1 // pred_check
      _
    $region3: #{tpu_custom_call.1} parent=1 // pred_check_branch
      %12 = sbr.rel (0) target = $region5
    $region4: #{tpu_custom_call.1} parent=1 // pred_region
      _
    $region5: #{tpu_custom_call.1} parent=1 // pred_fallthru
      _
    // Predicated region
    $region6: #{tpu_custom_call.1} parent=1 // pred_check
      _
    $region7: #{tpu_custom_call.1} parent=1 // pred_check_branch
      %14 = sbr.rel (0) target = $region9
    $region8: #{tpu_custom_call.1} parent=1 // pred_region
      _
    $region9: #{tpu_custom_call.1} parent=1 // pred_fallthru
      _
    // Predicated region
    $region10: #{tpu_custom_call.1} parent=1 // pred_check
      _
    $region11: #{tpu_custom_call.1} parent=1 // pred_check_branch
      %16 = sbr.rel (0) target = $region13
    $region12: #{tpu_custom_call.1} parent=1 // pred_region
      %s18 = ssub.s32 2048, 2048
      %19 = vsyncadd [#allocation3], %s18
      %s20 = sshll.u32 [#allocation2], 4
      %s21 = int_to_ptr.vmem [resolvable:$true] %s20
      %26 = dma.hbm_to_vmem [thread:$0]  %s2, 2048, %s21, [#allocation3], 64, 64, 4
    $region13: #{tpu_custom_call.1} parent=1 // pred_fallthru
      _
    // Predicated region
    $region14: #{tpu_custom_call.1} parent=1 // pred_check
      _
    $region15: #{tpu_custom_call.1} parent=1 // pred_check_branch
      %28 = sbr.rel (0) target = $region17
    $region16: #{tpu_custom_call.1} parent=1 // pred_region
      _
    $region17: #{tpu_custom_call.1} parent=1 // pred_fallthru
      _
    // Predicated region
    $region18: #{tpu_custom_call.1} parent=1 // pred_check
      _
    $region19: #{tpu_custom_call.1} parent=1 // pred_check_branch
      %30 = sbr.rel (0) target = $region21
    $region20: #{tpu_custom_call.1} parent=1 // pred_region
      %31 = dma.done [#allocation3], 2048
    $region21: #{tpu_custom_call.1} parent=1 // pred_fallthru
      _
    %v33 = vld [vmem:[%s0] sm:$0xff]
    %v34 = vld [vmem:[%s0 + $0x8] sm:$0xff]
    %v35 = vld [vmem:[#allocation2] sm:$0xf]
    %v36 = vld [vmem:[#allocation2 + $0x4] sm:$0xf]
    %v37 = vld [vmem:[#allocation2 + $0x8] sm:$0xf]
    %v38 = vld [vmem:[#allocation2 + $0xc] sm:$0xf]
    %v39 = vld [vmem:[#allocation2 + $0x10] sm:$0xf]
    %v40 = vld [vmem:[#allocation2 + $0x14] sm:$0xf]
    %v41 = vld [vmem:[#allocation2 + $0x18] sm:$0xf]
    %v42 = vld [vmem:[#allocation2 + $0x1c] sm:$0xf]
    %v43 = vld [vmem:[#allocation2 + $0x20] sm:$0xf]
    %v44 = vld [vmem:[#allocation2 + $0x24] sm:$0xf]
    %v45 = vld [vmem:[#allocation2 + $0x28] sm:$0xf]
    %v46 = vld [vmem:[#allocation2 + $0x2c] sm:$0xf]
    %v47 = vld [vmem:[#allocation2 + $0x30] sm:$0xf]
    %v48 = vld [vmem:[#allocation2 + $0x34] sm:$0xf]
    %v49 = vld [vmem:[#allocation2 + $0x38] sm:$0xf]
    %v50 = vld [vmem:[#allocation2 + $0x3c] sm:$0xf]
    %v51 = vld [vmem:[#allocation2 + $0x40] sm:$0xf]
    %v52 = vld [vmem:[#allocation2 + $0x44] sm:$0xf]
    %v53 = vld [vmem:[#allocation2 + $0x48] sm:$0xf]
    %v54 = vld [vmem:[#allocation2 + $0x4c] sm:$0xf]
    %v55 = vld [vmem:[#allocation2 + $0x50] sm:$0xf]
    %v56 = vld [vmem:[#allocation2 + $0x54] sm:$0xf]
    %v57 = vld [vmem:[#allocation2 + $0x58] sm:$0xf]
    %v58 = vld [vmem:[#allocation2 + $0x5c] sm:$0xf]
    %v59 = vld [vmem:[#allocation2 + $0x60] sm:$0xf]
    %v60 = vld [vmem:[#allocation2 + $0x64] sm:$0xf]
    %v61 = vld [vmem:[#allocation2 + $0x68] sm:$0xf]
    %v62 = vld [vmem:[#allocation2 + $0x6c] sm:$0xf]
    %v63 = vld [vmem:[#allocation2 + $0x70] sm:$0xf]
    %v64 = vld [vmem:[#allocation2 + $0x74] sm:$0xf]
    %v65 = vld [vmem:[#allocation2 + $0x78] sm:$0xf]
    %v66 = vld [vmem:[#allocation2 + $0x7c] sm:$0xf]
    %v67 = vld [vmem:[%s1] sm:$0xff]
    %v68 = vld [vmem:[%s1 + $0x8] sm:$0xff]
    %v69 = vld [vmem:[%s3] sm:$0x1]
    %71 = vset.pattern.permute.xlu0 0
    %72 = vperm.xlu0 %71, %v67
    %v73 = vpop.permute.xlu0 %72
    %76 = vset.pattern.permute.xlu0 0
    %77 = vperm.xlu0 %76, %v68
    %v78 = vpop.permute.xlu0 %77
    %v80 = vlaneseq
    %v81 = vshrl.u32 %v80, 7
    %v82 = vsub.s32 0, %v81
    %v83 = vrot.slane %v69, %v82
    %v84 = vmul.f32 %v73, %v83
    %v85 = vmul.f32 %v78, %v83
    %v88 = vunpack.c.l.b16 %v33
    %v89 = vunpack.c.h.b16 %v33
    %v90 = vunpack.c.l.b16 %v34
    %v91 = vunpack.c.h.b16 %v34
    %v92 = vpack.c.b16 %v90, %v88
    %v93 = vpack.c.b16 %v91, %v89
    %v128 = vunpack.c.l.b16 %v35
    %v129 = vunpack.c.l.b16 %v36
    %v130 = vunpack.c.l.b16 %v37
    %v131 = vunpack.c.l.b16 %v38
    %v132 = vunpack.c.l.b16 %v39
    %v133 = vunpack.c.l.b16 %v40
    %v134 = vunpack.c.l.b16 %v41
    %v135 = vunpack.c.l.b16 %v42
    %v136 = vunpack.c.l.b16 %v43
    %v137 = vunpack.c.l.b16 %v44
    %v138 = vunpack.c.l.b16 %v45
    %v139 = vunpack.c.l.b16 %v46
    %v140 = vunpack.c.l.b16 %v47
    %v141 = vunpack.c.l.b16 %v48
    %v142 = vunpack.c.l.b16 %v49
    %v143 = vunpack.c.l.b16 %v50
    %v144 = vunpack.c.l.b16 %v51
    %v145 = vunpack.c.l.b16 %v52
    %v146 = vunpack.c.l.b16 %v53
    %v147 = vunpack.c.l.b16 %v54
    %v148 = vunpack.c.l.b16 %v55
    %v149 = vunpack.c.l.b16 %v56
    %v150 = vunpack.c.l.b16 %v57
    %v151 = vunpack.c.l.b16 %v58
    %v152 = vunpack.c.l.b16 %v59
    %v153 = vunpack.c.l.b16 %v60
    %v154 = vunpack.c.l.b16 %v61
    %v155 = vunpack.c.l.b16 %v62
    %v156 = vunpack.c.l.b16 %v63
    %v157 = vunpack.c.l.b16 %v64
    %v158 = vunpack.c.l.b16 %v65
    %v159 = vunpack.c.l.b16 %v66
    %v160 = vpack.c.b16 %v129, %v128
    %v161 = vpack.c.b16 %v131, %v130
    %v162 = vpack.c.b16 %v133, %v132
    %v163 = vpack.c.b16 %v135, %v134
    %v164 = vpack.c.b16 %v137, %v136
    %v165 = vpack.c.b16 %v139, %v138
    %v166 = vpack.c.b16 %v141, %v140
    %v167 = vpack.c.b16 %v143, %v142
    %v168 = vpack.c.b16 %v145, %v144
    %v169 = vpack.c.b16 %v147, %v146
    %v170 = vpack.c.b16 %v149, %v148
    %v171 = vpack.c.b16 %v151, %v150
    %v172 = vpack.c.b16 %v153, %v152
    %v173 = vpack.c.b16 %v155, %v154
    %v174 = vpack.c.b16 %v157, %v156
    %v175 = vpack.c.b16 %v159, %v158
    %192 = vmatprep.subr.bf16.mxu0 0
    %193 = vmatpush1.bf16.msra.mxu0 %v160
    %194 = vmatprep.subr.bf16.mxu0 0
    %195 = vmatpush1.bf16.msra.mxu0 %v161
    %196 = vmatprep.subr.bf16.mxu0 0
    %197 = vmatpush1.bf16.msra.mxu0 %v162
    %198 = vmatprep.subr.bf16.mxu0 0
    %199 = vmatpush1.bf16.msra.mxu0 %v163
    %200 = vmatprep.subr.bf16.mxu0 0
    %201 = vmatpush1.bf16.msra.mxu0 %v164
    %202 = vmatprep.subr.bf16.mxu0 0
    %203 = vmatpush1.bf16.msra.mxu0 %v165
    %204 = vmatprep.subr.bf16.mxu0 0
    %205 = vmatpush1.bf16.msra.mxu0 %v166
    %206 = vmatprep.subr.bf16.mxu0 0
    %207 = vmatpush1.bf16.msra.mxu0 %v167
    %208 = vmatprep.subr.bf16.mxu0 0
    %209 = vmatpush1.bf16.msra.mxu0 %v168
    %210 = vmatprep.subr.bf16.mxu0 0
    %211 = vmatpush1.bf16.msra.mxu0 %v169
    %212 = vmatprep.subr.bf16.mxu0 0
    %213 = vmatpush1.bf16.msra.mxu0 %v170
    %214 = vmatprep.subr.bf16.mxu0 0
    %215 = vmatpush1.bf16.msra.mxu0 %v171
    %216 = vmatprep.subr.bf16.mxu0 0
    %217 = vmatpush1.bf16.msra.mxu0 %v172
    %218 = vmatprep.subr.bf16.mxu0 0
    %219 = vmatpush1.bf16.msra.mxu0 %v173
    %220 = vmatprep.subr.bf16.mxu0 0
    %221 = vmatpush1.bf16.msra.mxu0 %v174
    %222 = vmatprep.subr.bf16.mxu0 0
    %223 = vmatpush1.bf16.msra.mxu0 %v175
    %224 = vmatprep.mubr.bf16.mxu0 %v93
    %225 = vmatmul.mubr.bf16.gmra.mrb[0].mxu0 %v92
    %v226 = vpop.f32.mrb[0].mxu0
    %v227 = vadd.f32 %v84, %v226
    %v228 = vpop.f32.mrb[0].mxu0
    %v229 = vpop.f32.mrb[0].mxu0
    %v230 = vadd.f32 %v85, %v229
    %v231 = vpop.f32.mrb[0].mxu0
    %232 = vdwg.mxu0
    %v233 = vld [vmem:[%s3 + $0x1] sm:$0x1]
    %v234 = vlaneseq
    %v235 = vshrl.u32 %v234, 7
    %v236 = vsub.s32 0, %v235
    %v237 = vrot.slane %v233, %v236
    %v238 = vadd.f32 %v227, %v237
    %v239 = vadd.f32 %v230, %v237
    %v240 = vmax.f32 %v238, 0.0
    %v241 = vmax.f32 %v239, 0.0
    %v242 = vlaneseq
    %v243 = vand.u32 %v242, 127
    %vm244 = vcmp.ge.s32.totalorder %v243, 32
    %vm245 = vcmp.lt.s32.totalorder %v243, 64
    %vm246 = vmand %vm244, %vm245
    %v247 = vxor.u32 %v240, 2147483648
    %v248 = vxor.u32 %v241, 2147483648
    %v249 = vmul.f32 %v247, 1.442695
    %v250 = vpow.pop %v249
    %v251 = vmul.f32 %v248, 1.442695
    %v252 = vpow.pop %v251
    %v253 = vadd.f32 %v250, 1.0
    %v254 = vadd.f32 %v252, 1.0
    %v255 = vrcp.pop %v253
    %v256 = vmul.f32 1.0, %v255
    %v257 = vrcp.pop %v254
    %v258 = vmul.f32 1.0, %v257
    %v259 = vsel %vm246, %v256, %v240
    %v260 = vsel %vm246, %v258, %v241
    %261 = vst [vmem:[#allocation5] sm:$0xff] %v259
    %262 = vst [vmem:[#allocation5 + $0x8] sm:$0xff] %v260
    // Predicated region
    $region22: #{tpu_custom_call.1} parent=1 // pred_check
      _
    $region23: #{tpu_custom_call.1} parent=1 // pred_check_branch
      %264 = sbr.rel (0) target = $region25
    $region24: #{tpu_custom_call.1} parent=1 // pred_region
      %s266 = ssub.s32 256, 256
      %267 = vsyncadd [#allocation4], %s266
      %s268 = sshll.u32 [#allocation5], 4
      %s269 = int_to_ptr.vmem [resolvable:$true] %s268
      %274 = dma.vmem_to_hbm [thread:$0]  %s269, 256, %s4, [#allocation4], 128, 128, 8
    $region25: #{tpu_custom_call.1} parent=1 // pred_fallthru
      _
    // Predicated region
    $region26: #{tpu_custom_call.1} parent=1 // pred_check
      _
    $region27: #{tpu_custom_call.1} parent=1 // pred_check_branch
      %276 = sbr.rel (0) target = $region29
    $region28: #{tpu_custom_call.1} parent=1 // pred_region
      %277 = dma.done [#allocation4], 256
    $region29: #{tpu_custom_call.1} parent=1 // pred_fallthru
      _
    %278 = vsyncpa [#allocation3], 1
    %279 = vsyncpa [#allocation4], 1

</llo_original>
